<compile_context>
chip_gen: v7x
topology: tpu7x:2x2x1
jax: 0.10.0
libtpu: 0.0.40
codegen_flags: <defaults>
</compile_context>

<pallas_src>
import jax
import jax.numpy as jnp
from jax.experimental import pallas as pl
from jax.experimental.pallas import tpu as pltpu

BN_EPS = 1e-5


def _fused_kernel(x_ref, g_ref, w_ref, gamma_ref, beta_ref, o_ref):
    # x_ref     : (N, HW, Cin)   f32
    # g_ref     : (N, 1,  Cin)   f32
    # w_ref     : (Cin, Cpad)    f32   (1x1 conv weight, Cout zero-padded to 128)
    # gamma_ref : (1, Cpad)      f32   (padded entries are 0)
    # beta_ref  : (1, Cpad)      f32   (padded entries are 0)
    # o_ref     : (N*HW, Cpad)
    x = x_ref[...].astype(jnp.float32)                        # (N, HW, Cin)
    gate = jax.nn.sigmoid(g_ref[...].astype(jnp.float32))     # (N, 1, Cin) (EUP)
    y = x * gate                                              # broadcast over HW

    n, hw, cin = y.shape
    y2d = y.reshape(n * hw, cin)                              # free leading-dim collapse

    # Single MXU matmul: bf16 operands, f32 accumulator (BN math stays f32).
    z = jnp.dot(
        y2d.astype(jnp.bfloat16),
        w_ref[...].astype(jnp.bfloat16),
        preferred_element_type=jnp.float32,
    )                                                         # (N*HW, Cpad)

    # BatchNorm2d (training mode): biased batch stats over all rows (N, H, W).
    rows = z.shape[0]
    inv_rows = 1.0 / rows
    mean = jnp.sum(z, axis=0, keepdims=True) * inv_rows       # (1, Cpad)
    zc = z - mean                                             # reused for var and output
    var = jnp.sum(zc * zc, axis=0, keepdims=True) * inv_rows
    scale = jax.lax.rsqrt(var + BN_EPS) * gamma_ref[...]      # gamma*inv folded once
    o_ref[...] = (zc * scale + beta_ref[...]).astype(o_ref.dtype)


def fused_se_conv_bn(x_nchw, gate_nc11, weight_oi, gamma, beta):
    """x_nchw: (N, Cin, H, W), gate_nc11: (N, Cin, 1, 1),
    weight_oi: (Cout, Cin) (PyTorch 1x1 conv weight squeezed),
    gamma/beta: (Cout,). Returns (N, Cout, H, W) — PyTorch training-mode fwd."""
    N, Cin, H, W = x_nchw.shape
    Cout = weight_oi.shape[0]
    HW = H * W
    Cpad = max(128, ((Cout + 127) // 128) * 128)              # lane-dense output width

    # Layout plumbing (NCHW -> channels-last, flattened spatial). The input
    # transpose is allowed to fuse into the pallas_call via allow_input_fusion.
    x = jnp.transpose(x_nchw, (0, 2, 3, 1)).reshape(N, HW, Cin)
    gate = gate_nc11.reshape(N, 1, Cin)

    w = jnp.transpose(weight_oi, (1, 0)).astype(jnp.float32)  # (Cin, Cout)
    w_pad = jnp.pad(w, ((0, 0), (0, Cpad - Cout)))            # (Cin, Cpad)
    # Padded gamma/beta must be 0 so padded channels stay exactly 0.
    gamma_pad = jnp.pad(gamma.astype(jnp.float32), (0, Cpad - Cout)).reshape(1, Cpad)
    beta_pad = jnp.pad(beta.astype(jnp.float32), (0, Cpad - Cout)).reshape(1, Cpad)

    vmem = pl.BlockSpec(memory_space=pltpu.MemorySpace.VMEM)

    cost = pl.CostEstimate(
        flops=2 * N * HW * Cin * Cpad + 8 * N * HW * Cpad,    # matmul + BN epilogue
        transcendentals=N * Cin,                              # sigmoid
        bytes_accessed=4 * (x.size + gate.size + w_pad.size
                            + gamma_pad.size + beta_pad.size + N * HW * Cpad),
    )

    out2d = pl.pallas_call(
        _fused_kernel,
        out_shape=jax.ShapeDtypeStruct((N * HW, Cpad), x_nchw.dtype),
        in_specs=[vmem, vmem, vmem, vmem, vmem],
        out_specs=vmem,
        compiler_params=pltpu.CompilerParams(
            allow_input_fusion=[True, False, False, False, False],
        ),
        cost_estimate=cost,
    )(x, gate, w_pad, gamma_pad, beta_pad)

    # (N*HW, Cpad) -> slice real channels -> NCHW
    out = out2d[:, :Cout].reshape(N, H, W, Cout)
    return jnp.transpose(out, (0, 3, 1, 2))


def _reference(x_nchw, gate_nc11, weight_oi, gamma, beta,
               matmul_dtype=jnp.float32):
    """Pure-JAX reference matching PyTorch training-mode forward."""
    s = jax.nn.sigmoid(gate_nc11)
    y = x_nchw * s                                            # (N, Cin, H, W)
    z = jnp.einsum(
        "nchw,oc->nohw",
        y.astype(matmul_dtype), weight_oi.astype(matmul_dtype),
        preferred_element_type=jnp.float32,
    )
    mean = jnp.mean(z, axis=(0, 2, 3), keepdims=True)
    var = jnp.mean((z - mean) ** 2, axis=(0, 2, 3), keepdims=True)
    zn = (z - mean) * jax.lax.rsqrt(var + BN_EPS)
    return zn * gamma.reshape(1, -1, 1, 1) + beta.reshape(1, -1, 1, 1)


if __name__ == "__main__":
    # Channels fixed by the module (384 -> 64); small batch/spatial so the
    # flattened row dim is exactly 128 (one full MXU M tile).
    N, Cin, Cout, H, W = 2, 384, 64, 8, 8

    key = jax.random.PRNGKey(0)
    k1, k2, k3 = jax.random.split(key, 3)

    x150 = jax.random.normal(k1, (N, Cin, H, W), dtype=jnp.float32)
    x154 = jax.random.normal(k2, (N, Cin, 1, 1), dtype=jnp.float32)

    # Conv2d(384, 64, 1x1, bias=False) weight, deterministic init.
    conv_w = (jax.random.normal(k3, (Cout, Cin), dtype=jnp.float32)
              * (1.0 / jnp.sqrt(Cin)))
    # BatchNorm2d(64) affine params at their PyTorch init values.
    gamma = jnp.ones((Cout,), dtype=jnp.float32)
    beta = jnp.zeros((Cout,), dtype=jnp.float32)

    out = jax.block_until_ready(fused_se_conv_bn(x150, x154, conv_w, gamma, beta))
    assert out.shape == (N, Cout, H, W)

    # Tight check against a reference that uses the same bf16-operand /
    # f32-accumulator matmul (validates everything except the bf16 cast).
    ref_bf16 = _reference(x150, x154, conv_w, gamma, beta,
                          matmul_dtype=jnp.bfloat16)
    assert jnp.allclose(out, ref_bf16, atol=2e-3, rtol=2e-3)

    # Looser check against the pure-f32 PyTorch-equivalent forward; slack
    # covers only the bf16 rounding of the matmul operands.
    ref_f32 = _reference(x150, x154, conv_w, gamma, beta)
    assert jnp.allclose(out, ref_f32, atol=3e-2, rtol=3e-2)

    print("KERNEL_OK")
</pallas_src>

<mosaic_0001>
module attributes {stable_mosaic.version = 11 : i64} {
  func.func @_fused_kernel(%arg0: memref<2x64x384xf32, #tpu.memory_space<vmem>>, %arg1: memref<2x1x384xf32, #tpu.memory_space<vmem>>, %arg2: memref<384x128xf32, #tpu.memory_space<vmem>>, %arg3: memref<1x128xf32, #tpu.memory_space<vmem>>, %arg4: memref<1x128xf32, #tpu.memory_space<vmem>>, %arg5: memref<128x128xf32, #tpu.memory_space<vmem>>) attributes {dimension_semantics = [], scalar_prefetch = 0 : i64, scratch_operands = 0 : i64, tpu.core_type = #tpu.core_type<tc>} {
    %c0 = arith.constant 0 : index
    %c0_0 = arith.constant 0 : index
    %c0_1 = arith.constant 0 : index
    %0 = vector.load %arg0[%c0, %c0_0, %c0_1] : memref<2x64x384xf32, #tpu.memory_space<vmem>>, vector<2x64x384xf32>
    %c0_2 = arith.constant 0 : index
    %c0_3 = arith.constant 0 : index
    %c0_4 = arith.constant 0 : index
    %1 = vector.load %arg1[%c0_2, %c0_3, %c0_4] : memref<2x1x384xf32, #tpu.memory_space<vmem>>, vector<2x1x384xf32>
    %2 = arith.negf %1 : vector<2x1x384xf32>
    %3 = math.exp %2 : vector<2x1x384xf32>
    %cst = arith.constant 1.000000e+00 : f32
    %4 = vector.broadcast %cst : f32 to vector<2x1x384xf32>
    %5 = arith.addf %4, %3 : vector<2x1x384xf32>
    %6 = arith.divf %4, %5 : vector<2x1x384xf32>
    %7 = vector.broadcast %6 : vector<2x1x384xf32> to vector<2x64x384xf32>
    %8 = arith.mulf %0, %7 : vector<2x64x384xf32>
    %9 = vector.shape_cast %8 : vector<2x64x384xf32> to vector<128x384xf32>
    %10 = arith.truncf %9 : vector<128x384xf32> to vector<128x384xbf16>
    %c0_5 = arith.constant 0 : index
    %c0_6 = arith.constant 0 : index
    %11 = vector.load %arg2[%c0_5, %c0_6] : memref<384x128xf32, #tpu.memory_space<vmem>>, vector<384x128xf32>
    %12 = arith.truncf %11 : vector<384x128xf32> to vector<384x128xbf16>
    %cst_7 = arith.constant dense<0.000000e+00> : vector<128x128xf32>
    %13 = tpu.matmul %10, %12, %cst_7 {dimension_numbers = #tpu.dot_dimension_numbers<[1], [0], [0], [1], [0, 0, 1, 1], [], []>} : vector<128x384xbf16>, vector<384x128xbf16>, vector<128x128xf32> -> vector<128x128xf32>
    %cst_8 = arith.constant dense<0.000000e+00> : vector<128xf32>
    %14 = vector.multi_reduction <add>, %13, %cst_8 [0] : vector<128x128xf32> to vector<128xf32>
    %15 = vector.shape_cast %14 : vector<128xf32> to vector<1x128xf32>
    %cst_9 = arith.constant 7.812500e-03 : f32
    %16 = vector.broadcast %cst_9 : f32 to vector<1x128xf32>
    %17 = arith.mulf %15, %16 : vector<1x128xf32>
    %18 = vector.broadcast %17 : vector<1x128xf32> to vector<128x128xf32>
    %19 = arith.subf %13, %18 : vector<128x128xf32>
    %20 = arith.mulf %19, %19 : vector<128x128xf32>
    %cst_10 = arith.constant dense<0.000000e+00> : vector<128xf32>
    %21 = vector.multi_reduction <add>, %20, %cst_10 [0] : vector<128x128xf32> to vector<128xf32>
    %22 = vector.shape_cast %21 : vector<128xf32> to vector<1x128xf32>
    %cst_11 = arith.constant 7.812500e-03 : f32
    %23 = vector.broadcast %cst_11 : f32 to vector<1x128xf32>
    %24 = arith.mulf %22, %23 : vector<1x128xf32>
    %cst_12 = arith.constant 9.99999974E-6 : f32
    %25 = vector.broadcast %cst_12 : f32 to vector<1x128xf32>
    %26 = arith.addf %24, %25 : vector<1x128xf32>
    %27 = math.rsqrt %26 : vector<1x128xf32>
    %c0_13 = arith.constant 0 : index
    %c0_14 = arith.constant 0 : index
    %28 = vector.load %arg3[%c0_13, %c0_14] : memref<1x128xf32, #tpu.memory_space<vmem>>, vector<1x128xf32>
    %29 = arith.mulf %27, %28 : vector<1x128xf32>
    %30 = vector.broadcast %29 : vector<1x128xf32> to vector<128x128xf32>
    %31 = arith.mulf %19, %30 : vector<128x128xf32>
    %c0_15 = arith.constant 0 : index
    %c0_16 = arith.constant 0 : index
    %32 = vector.load %arg4[%c0_15, %c0_16] : memref<1x128xf32, #tpu.memory_space<vmem>>, vector<1x128xf32>
    %33 = vector.broadcast %32 : vector<1x128xf32> to vector<128x128xf32>
    %34 = arith.addf %31, %33 : vector<128x128xf32>
    %c0_17 = arith.constant 0 : index
    %c0_18 = arith.constant 0 : index
    %35 = vector.load %arg5[%c0_17, %c0_18] : memref<128x128xf32, #tpu.memory_space<vmem>>, vector<128x128xf32>
    tpu.vector_store %arg5[%c0_17, %c0_18], %34 {strides = array<i32>} : memref<128x128xf32, #tpu.memory_space<vmem>>, vector<128x128xf32>,
    return
  }
}

</mosaic_0001>

<llo_original>
// kernel: tpu_custom_call.1
$region0: #{tpu_custom_call.1}
  #allocation0 [shape = 'u32[]', space=smem, size = 0x4, offset = 0x4, fixed_abs, tag = 'smem constant byte address 0x4 - core index']
  #allocation1 [shape = 'u32[144,128]{1,0:T(1,128)}', space=vmem, size = 0x12000, scoped, tag = 'internal scratch']
  %s0 = inlined_call_operand.hbm [shape: f32[2,64,384], index: 0, kind: input, shape index: {}]
  %s1 = inlined_call_operand.hbm [shape: f32[2,1,384], index: 1, kind: input, shape index: {}]
  %s2 = inlined_call_operand.hbm [shape: f32[384,128], index: 2, kind: input, shape index: {}]
  %s3 = inlined_call_operand.vmem [shape: f32[1,128], index: 3, kind: input, shape index: {}]
  %s4 = inlined_call_operand.vmem [shape: f32[1,128], index: 4, kind: input, shape index: {}]
  %s5 = inlined_call_operand.hbm [shape: f32[128,128], index: 5, kind: output, shape index: {}]
  %s6 = sld [smem:[#allocation0]]
  $region42: #{tpu_custom_call.1} parent=0
    _
  %s8 = ssub.s32 1, %s6
  %s9 = scalar_select 0, %s8, %s6
  $region1: #{tpu_custom_call.1} parent=0
    #allocation2 [shape = 'u8[196608]{0}', space=vmem, size = 0x30000, scoped, tag = 'input window, operand 0, single buffered']
    #allocation3 [shape = 's32[1]{0}', space=sflag, size = 0x4, scoped, tag = 'scoped memory for tpu_custom_call.1']
    #allocation4 [shape = 's32[1]{0}', space=sflag, size = 0x4, scoped, tag = 'scoped memory for tpu_custom_call.1']
    #allocation5 [shape = 'u8[3072]{0}', space=vmem, size = 0xc00, scoped, tag = 'input window, operand 1, single buffered']
    #allocation6 [shape = 's32[1]{0}', space=sflag, size = 0x4, scoped, tag = 'scoped memory for tpu_custom_call.1']
    #allocation7 [shape = 'u8[196608]{0}', space=vmem, size = 0x30000, scoped, tag = 'input window, operand 2, single buffered']
    #allocation8 [shape = 'u8[65536]{0}', space=vmem, size = 0x10000, scoped, tag = 'output window, operand 0, single buffered']
    %10 = vsyncpa [#allocation3], 0
    %11 = vsyncpa [#allocation6], 0
    %12 = vsyncpa [#allocation4], 0
    // Predicated region
    $region2: #{tpu_custom_call.1} parent=1 // pred_check
      _
    $region3: #{tpu_custom_call.1} parent=1 // pred_check_branch
      %14 = sbr.rel (0) target = $region5
    $region4: #{tpu_custom_call.1} parent=1 // pred_region
      %s16 = ssub.s32 6144, 6144
      %17 = vsyncadd [#allocation3], %s16
      %s18 = sshll.u32 [#allocation2], 4
      %s19 = int_to_ptr.vmem [resolvable:$true] %s18
      %24 = dma.hbm_to_vmem [thread:$0]  %s0, 6144, %s19, [#allocation3], 384, 384, 24
    $region5: #{tpu_custom_call.1} parent=1 // pred_fallthru
      _
    // Predicated region
    $region6: #{tpu_custom_call.1} parent=1 // pred_check
      _
    $region7: #{tpu_custom_call.1} parent=1 // pred_check_branch
      %26 = sbr.rel (0) target = $region9
    $region8: #{tpu_custom_call.1} parent=1 // pred_region
      %s28 = ssub.s32 96, 96
      %29 = vsyncadd [#allocation6], %s28
      %s30 = sshll.u32 [#allocation5], 4
      %s31 = int_to_ptr.vmem [resolvable:$true] %s30
      %36 = dma.hbm_to_vmem [thread:$0]  %s1, 96, %s31, [#allocation6], 48, 48, 3
    $region9: #{tpu_custom_call.1} parent=1 // pred_fallthru
      _
    // Predicated region
    $region10: #{tpu_custom_call.1} parent=1 // pred_check
      _
    $region11: #{tpu_custom_call.1} parent=1 // pred_check_branch
      %38 = sbr.rel (0) target = $region13
    $region12: #{tpu_custom_call.1} parent=1 // pred_region
      %s40 = ssub.s32 6144, 6144
      %41 = vsyncadd [#allocation6], %s40
      %s42 = sshll.u32 [#allocation7], 4
      %s43 = int_to_ptr.vmem [resolvable:$true] %s42
      %48 = dma.hbm_to_vmem [thread:$0]  %s2, 6144, %s43, [#allocation6], 128, 128, 8
    $region13: #{tpu_custom_call.1} parent=1 // pred_fallthru
      _
    // Predicated region
    $region14: #{tpu_custom_call.1} parent=1 // pred_check
      _
    $region15: #{tpu_custom_call.1} parent=1 // pred_check_branch
      %50 = sbr.rel (0) target = $region17
    $region16: #{tpu_custom_call.1} parent=1 // pred_region
      _
    $region17: #{tpu_custom_call.1} parent=1 // pred_fallthru
      _
    // Predicated region
    $region18: #{tpu_custom_call.1} parent=1 // pred_check
      _
    $region19: #{tpu_custom_call.1} parent=1 // pred_check_branch
      %52 = sbr.rel (0) target = $region21
    $region20: #{tpu_custom_call.1} parent=1 // pred_region
      _
    $region21: #{tpu_custom_call.1} parent=1 // pred_fallthru
      _
    // Predicated region
    $region22: #{tpu_custom_call.1} parent=1 // pred_check
      _
    $region23: #{tpu_custom_call.1} parent=1 // pred_check_branch
      %54 = sbr.rel (0) target = $region25
    $region24: #{tpu_custom_call.1} parent=1 // pred_region
      %55 = dma.done [#allocation3], 6144
    $region25: #{tpu_custom_call.1} parent=1 // pred_fallthru
      _
    // Predicated region
    $region26: #{tpu_custom_call.1} parent=1 // pred_check
      _
    $region27: #{tpu_custom_call.1} parent=1 // pred_check_branch
      %57 = sbr.rel (0) target = $region29
    $region28: #{tpu_custom_call.1} parent=1 // pred_region
      %58 = dma.done [#allocation6], 96
    $region29: #{tpu_custom_call.1} parent=1 // pred_fallthru
      _
    // Predicated region
    $region30: #{tpu_custom_call.1} parent=1 // pred_check
      _
    $region31: #{tpu_custom_call.1} parent=1 // pred_check_branch
      %60 = sbr.rel (0) target = $region33
    $region32: #{tpu_custom_call.1} parent=1 // pred_region
      %61 = dma.done [#allocation6], 6144
    $region33: #{tpu_custom_call.1} parent=1 // pred_fallthru
      _
    %v63 = vld [vmem:[#allocation2] sm:$0xff]
    %v64 = vld [vmem:[#allocation2 + $0x8] sm:$0xff]
    %v65 = vld [vmem:[#allocation2 + $0x10] sm:$0xff]
    %v66 = vld [vmem:[#allocation2 + $0x18] sm:$0xff]
    %v67 = vld [vmem:[#allocation2 + $0x20] sm:$0xff]
    %v68 = vld [vmem:[#allocation2 + $0x28] sm:$0xff]
    %v69 = vld [vmem:[#allocation2 + $0x30] sm:$0xff]
    %v70 = vld [vmem:[#allocation2 + $0x38] sm:$0xff]
    %v71 = vld [vmem:[#allocation2 + $0x40] sm:$0xff]
    %v72 = vld [vmem:[#allocation2 + $0x48] sm:$0xff]
    %v73 = vld [vmem:[#allocation2 + $0x50] sm:$0xff]
    %v74 = vld [vmem:[#allocation2 + $0x58] sm:$0xff]
    %v75 = vld [vmem:[#allocation2 + $0x60] sm:$0xff]
    %v76 = vld [vmem:[#allocation2 + $0x68] sm:$0xff]
    %v77 = vld [vmem:[#allocation2 + $0x70] sm:$0xff]
    %v78 = vld [vmem:[#allocation2 + $0x78] sm:$0xff]
    %v79 = vld [vmem:[#allocation2 + $0x80] sm:$0xff]
    %v80 = vld [vmem:[#allocation2 + $0x88] sm:$0xff]
    %v81 = vld [vmem:[#allocation2 + $0x90] sm:$0xff]
    %v82 = vld [vmem:[#allocation2 + $0x98] sm:$0xff]
    %v83 = vld [vmem:[#allocation2 + $0xa0] sm:$0xff]
    %v84 = vld [vmem:[#allocation2 + $0xa8] sm:$0xff]
    %v85 = vld [vmem:[#allocation2 + $0xb0] sm:$0xff]
    %v86 = vld [vmem:[#allocation2 + $0xb8] sm:$0xff]
    %v87 = vld [vmem:[#allocation2 + $0xc0] sm:$0xff]
    %v88 = vld [vmem:[#allocation2 + $0xc8] sm:$0xff]
    %v89 = vld [vmem:[#allocation2 + $0xd0] sm:$0xff]
    %v90 = vld [vmem:[#allocation2 + $0xd8] sm:$0xff]
    %v91 = vld [vmem:[#allocation2 + $0xe0] sm:$0xff]
    %v92 = vld [vmem:[#allocation2 + $0xe8] sm:$0xff]
    %v93 = vld [vmem:[#allocation2 + $0xf0] sm:$0xff]
    %v94 = vld [vmem:[#allocation2 + $0xf8] sm:$0xff]
    %v95 = vld [vmem:[#allocation2 + $0x100] sm:$0xff]
    %v96 = vld [vmem:[#allocation2 + $0x108] sm:$0xff]
    %v97 = vld [vmem:[#allocation2 + $0x110] sm:$0xff]
    %v98 = vld [vmem:[#allocation2 + $0x118] sm:$0xff]
    %v99 = vld [vmem:[#allocation2 + $0x120] sm:$0xff]
    %v100 = vld [vmem:[#allocation2 + $0x128] sm:$0xff]
    %v101 = vld [vmem:[#allocation2 + $0x130] sm:$0xff]
    %v102 = vld [vmem:[#allocation2 + $0x138] sm:$0xff]
    %v103 = vld [vmem:[#allocation2 + $0x140] sm:$0xff]
    %v104 = vld [vmem:[#allocation2 + $0x148] sm:$0xff]
    %v105 = vld [vmem:[#allocation2 + $0x150] sm:$0xff]
    %v106 = vld [vmem:[#allocation2 + $0x158] sm:$0xff]
    %v107 = vld [vmem:[#allocation2 + $0x160] sm:$0xff]
    %v108 = vld [vmem:[#allocation2 + $0x168] sm:$0xff]
    %v109 = vld [vmem:[#allocation2 + $0x170] sm:$0xff]
    %v110 = vld [vmem:[#allocation2 + $0x178] sm:$0xff]
    %v111 = vld [vmem:[#allocation5] sm:$0x7]
    %v112 = vld [vmem:[#allocation5 + $0x3] sm:$0x7]
    %v113 = vxor.u32 %v111, 2147483648
    %v114 = vxor.u32 %v112, 2147483648
    %v115 = vmul.f32 %v113, 1.442695
    %v116 = vpow.pop %v115
    %v117 = vmul.f32 %v114, 1.442695
    %v118 = vpow.pop %v117
    %v119 = vadd.f32 %v116, 1.0
    %v120 = vadd.f32 %v118, 1.0
    %v121 = vrcp.pop %v119
    %v122 = vmul.f32 1.0, %v121
    %v123 = vrcp.pop %v120
    %v124 = vmul.f32 1.0, %v123
    %v127 = vlaneseq
    %v128 = vshrl.u32 %v127, 7
    %v129 = vsub.s32 0, %v128
    %v130 = vrot.slane %v122, %v129
    %v131 = vlaneseq
    %v132 = vshrl.u32 %v131, 7
    %v133 = vsub.s32 1, %v132
    %v134 = vrot.slane %v122, %v133
    %v135 = vlaneseq
    %v136 = vshrl.u32 %v135, 7
    %v137 = vsub.s32 2, %v136
    %v138 = vrot.slane %v122, %v137
    %v139 = vlaneseq
    %v140 = vshrl.u32 %v139, 7
    %v141 = vsub.s32 0, %v140
    %v142 = vrot.slane %v124, %v141
    %v143 = vlaneseq
    %v144 = vshrl.u32 %v143, 7
    %v145 = vsub.s32 1, %v144
    %v146 = vrot.slane %v124, %v145
    %v147 = vlaneseq
    %v148 = vshrl.u32 %v147, 7
    %v149 = vsub.s32 2, %v148
    %v150 = vrot.slane %v124, %v149
    %v157 = vmul.f32 %v63, %v130
    %v158 = vmul.f32 %v64, %v134
    %v159 = vmul.f32 %v65, %v138
    %v160 = vmul.f32 %v66, %v130
    %v161 = vmul.f32 %v67, %v134
    %v162 = vmul.f32 %v68, %v138
    %v163 = vmul.f32 %v69, %v130
    %v164 = vmul.f32 %v70, %v134
    %v165 = vmul.f32 %v71, %v138
    %v166 = vmul.f32 %v72, %v130
    %v167 = vmul.f32 %v73, %v134
    %v168 = vmul.f32 %v74, %v138
    %v169 = vmul.f32 %v75, %v130
    %v170 = vmul.f32 %v76, %v134
    %v171 = vmul.f32 %v77, %v138
    %v172 = vmul.f32 %v78, %v130
    %v173 = vmul.f32 %v79, %v134
    %v174 = vmul.f32 %v80, %v138
    %v175 = vmul.f32 %v81, %v130
    %v176 = vmul.f32 %v82, %v134
    %v177 = vmul.f32 %v83, %v138
    %v178 = vmul.f32 %v84, %v130
    %v179 = vmul.f32 %v85, %v134
    %v180 = vmul.f32 %v86, %v138
    %v181 = vmul.f32 %v87, %v142
    %v182 = vmul.f32 %v88, %v146
    %v183 = vmul.f32 %v89, %v150
    %v184 = vmul.f32 %v90, %v142
    %v185 = vmul.f32 %v91, %v146
    %v186 = vmul.f32 %v92, %v150
    %v187 = vmul.f32 %v93, %v142
    %v188 = vmul.f32 %v94, %v146
    %v189 = vmul.f32 %v95, %v150
    %v190 = vmul.f32 %v96, %v142
    %v191 = vmul.f32 %v97, %v146
    %v192 = vmul.f32 %v98, %v150
    %v193 = vmul.f32 %v99, %v142
    %v194 = vmul.f32 %v100, %v146
    %v195 = vmul.f32 %v101, %v150
    %v196 = vmul.f32 %v102, %v142
    %v197 = vmul.f32 %v103, %v146
    %v198 = vmul.f32 %v104, %v150
    %v199 = vmul.f32 %v105, %v142
    %v200 = vmul.f32 %v106, %v146
    %v201 = vmul.f32 %v107, %v150
    %v202 = vmul.f32 %v108, %v142
    %v203 = vmul.f32 %v109, %v146
    %v204 = vmul.f32 %v110, %v150
    %v205 = vpack.c.bf16 %v160, %v157
    %v206 = vpack.c.bf16 %v161, %v158
    %v207 = vpack.c.bf16 %v162, %v159
    %v208 = vpack.c.bf16 %v166, %v163
    %v209 = vpack.c.bf16 %v167, %v164
    %v210 = vpack.c.bf16 %v168, %v165
    %v211 = vpack.c.bf16 %v172, %v169
    %v212 = vpack.c.bf16 %v173, %v170
    %v213 = vpack.c.bf16 %v174, %v171
    %v214 = vpack.c.bf16 %v178, %v175
    %v215 = vpack.c.bf16 %v179, %v176
    %v216 = vpack.c.bf16 %v180, %v177
    %v217 = vpack.c.bf16 %v184, %v181
    %v218 = vpack.c.bf16 %v185, %v182
    %v219 = vpack.c.bf16 %v186, %v183
    %v220 = vpack.c.bf16 %v190, %v187
    %v221 = vpack.c.bf16 %v191, %v188
    %v222 = vpack.c.bf16 %v192, %v189
    %v223 = vpack.c.bf16 %v196, %v193
    %v224 = vpack.c.bf16 %v197, %v194
    %v225 = vpack.c.bf16 %v198, %v195
    %v226 = vpack.c.bf16 %v202, %v199
    %v227 = vpack.c.bf16 %v203, %v200
    %v228 = vpack.c.bf16 %v204, %v201
    %v229 = vld [vmem:[#allocation7] sm:$0xff]
    %v230 = vld [vmem:[#allocation7 + $0x8] sm:$0xff]
    %v231 = vld [vmem:[#allocation7 + $0x10] sm:$0xff]
    %v232 = vld [vmem:[#allocation7 + $0x18] sm:$0xff]
    %v233 = vld [vmem:[#allocation7 + $0x20] sm:$0xff]
    %v234 = vld [vmem:[#allocation7 + $0x28] sm:$0xff]
    %v235 = vld [vmem:[#allocation7 + $0x30] sm:$0xff]
    %v236 = vld [vmem:[#allocation7 + $0x38] sm:$0xff]
    %v237 = vld [vmem:[#allocation7 + $0x40] sm:$0xff]
    %v238 = vld [vmem:[#allocation7 + $0x48] sm:$0xff]
    %v239 = vld [vmem:[#allocation7 + $0x50] sm:$0xff]
    %v240 = vld [vmem:[#allocation7 + $0x58] sm:$0xff]
    %v241 = vld [vmem:[#allocation7 + $0x60] sm:$0xff]
    %v242 = vld [vmem:[#allocation7 + $0x68] sm:$0xff]
    %v243 = vld [vmem:[#allocation7 + $0x70] sm:$0xff]
    %v244 = vld [vmem:[#allocation7 + $0x78] sm:$0xff]
    %v245 = vld [vmem:[#allocation7 + $0x80] sm:$0xff]
    %v246 = vld [vmem:[#allocation7 + $0x88] sm:$0xff]
    %v247 = vld [vmem:[#allocation7 + $0x90] sm:$0xff]
    %v248 = vld [vmem:[#allocation7 + $0x98] sm:$0xff]
    %v249 = vld [vmem:[#allocation7 + $0xa0] sm:$0xff]
    %v250 = vld [vmem:[#allocation7 + $0xa8] sm:$0xff]
    %v251 = vld [vmem:[#allocation7 + $0xb0] sm:$0xff]
    %v252 = vld [vmem:[#allocation7 + $0xb8] sm:$0xff]
    %v253 = vld [vmem:[#allocation7 + $0xc0] sm:$0xff]
    %v254 = vld [vmem:[#allocation7 + $0xc8] sm:$0xff]
    %v255 = vld [vmem:[#allocation7 + $0xd0] sm:$0xff]
    %v256 = vld [vmem:[#allocation7 + $0xd8] sm:$0xff]
    %v257 = vld [vmem:[#allocation7 + $0xe0] sm:$0xff]
    %v258 = vld [vmem:[#allocation7 + $0xe8] sm:$0xff]
    %v259 = vld [vmem:[#allocation7 + $0xf0] sm:$0xff]
    %v260 = vld [vmem:[#allocation7 + $0xf8] sm:$0xff]
    %v261 = vld [vmem:[#allocation7 + $0x100] sm:$0xff]
    %v262 = vld [vmem:[#allocation7 + $0x108] sm:$0xff]
    %v263 = vld [vmem:[#allocation7 + $0x110] sm:$0xff]
    %v264 = vld [vmem:[#allocation7 + $0x118] sm:$0xff]
    %v265 = vld [vmem:[#allocation7 + $0x120] sm:$0xff]
    %v266 = vld [vmem:[#allocation7 + $0x128] sm:$0xff]
    %v267 = vld [vmem:[#allocation7 + $0x130] sm:$0xff]
    %v268 = vld [vmem:[#allocation7 + $0x138] sm:$0xff]
    %v269 = vld [vmem:[#allocation7 + $0x140] sm:$0xff]
    %v270 = vld [vmem:[#allocation7 + $0x148] sm:$0xff]
    %v271 = vld [vmem:[#allocation7 + $0x150] sm:$0xff]
    %v272 = vld [vmem:[#allocation7 + $0x158] sm:$0xff]
    %v273 = vld [vmem:[#allocation7 + $0x160] sm:$0xff]
    %v274 = vld [vmem:[#allocation7 + $0x168] sm:$0xff]
    %v275 = vld [vmem:[#allocation7 + $0x170] sm:$0xff]
    %v276 = vld [vmem:[#allocation7 + $0x178] sm:$0xff]
    %v277 = vpack.c.bf16 %v230, %v229
    %v278 = vpack.c.bf16 %v232, %v231
    %v279 = vpack.c.bf16 %v234, %v233
    %v280 = vpack.c.bf16 %v236, %v235
    %v281 = vpack.c.bf16 %v238, %v237
    %v282 = vpack.c.bf16 %v240, %v239
    %v283 = vpack.c.bf16 %v242, %v241
    %v284 = vpack.c.bf16 %v244, %v243
    %v285 = vpack.c.bf16 %v246, %v245
    %v286 = vpack.c.bf16 %v248, %v247
    %v287 = vpack.c.bf16 %v250, %v249
    %v288 = vpack.c.bf16 %v252, %v251
    %v289 = vpack.c.bf16 %v254, %v253
    %v290 = vpack.c.bf16 %v256, %v255
    %v291 = vpack.c.bf16 %v258, %v257
    %v292 = vpack.c.bf16 %v260, %v259
    %v293 = vpack.c.bf16 %v262, %v261
    %v294 = vpack.c.bf16 %v264, %v263
    %v295 = vpack.c.bf16 %v266, %v265
    %v296 = vpack.c.bf16 %v268, %v267
    %v297 = vpack.c.bf16 %v270, %v269
    %v298 = vpack.c.bf16 %v272, %v271
    %v299 = vpack.c.bf16 %v274, %v273
    %v300 = vpack.c.bf16 %v276, %v275
    %301 = vmatprep.subr.bf16.mxu0 0
    %302 = vmatpush1.bf16.msra.mxu0 %v277
    %303 = vmatprep.subr.bf16.mxu0 0
    %304 = vmatpush1.bf16.msra.mxu0 %v278
    %305 = vmatprep.subr.bf16.mxu0 0
    %306 = vmatpush1.bf16.msra.mxu0 %v279
    %307 = vmatprep.subr.bf16.mxu0 0
    %308 = vmatpush1.bf16.msra.mxu0 %v280
    %309 = vmatprep.subr.bf16.mxu0 0
    %310 = vmatpush1.bf16.msra.mxu0 %v281
    %311 = vmatprep.subr.bf16.mxu0 0
    %312 = vmatpush1.bf16.msra.mxu0 %v282
    %313 = vmatprep.subr.bf16.mxu0 0
    %314 = vmatpush1.bf16.msra.mxu0 %v283
    %315 = vmatprep.subr.bf16.mxu0 0
    %316 = vmatpush1.bf16.msra.mxu0 %v284
    %317 = vmatprep.subr.bf16.mxu0 0
    %318 = vmatpush1.bf16.msra.mxu0 %v285
    %319 = vmatprep.subr.bf16.mxu0 0
    %320 = vmatpush1.bf16.msra.mxu0 %v286
    %321 = vmatprep.subr.bf16.mxu0 0
    %322 = vmatpush1.bf16.msra.mxu0 %v287
    %323 = vmatprep.subr.bf16.mxu0 0
    %324 = vmatpush1.bf16.msra.mxu0 %v288
    %325 = vmatprep.subr.bf16.mxu0 0
    %326 = vmatpush1.bf16.msra.mxu0 %v289
    %327 = vmatprep.subr.bf16.mxu0 0
    %328 = vmatpush1.bf16.msra.mxu0 %v290
    %329 = vmatprep.subr.bf16.mxu0 0
    %330 = vmatpush1.bf16.msra.mxu0 %v291
    %331 = vmatprep.subr.bf16.mxu0 0
    %332 = vmatpush1.bf16.msra.mxu0 %v292
    %333 = vmatprep.mubr.bf16.mxu0 %v206
    %334 = vmatmul.mubr.bf16.gmra.mrb[0].mxu0 %v205
    %v335 = vpop.f32.mrb[0].mxu0
    %v336 = vadd.f32 0.0, %v335
    %v337 = vpop.f32.mrb[0].mxu0
    %v338 = vpop.f32.mrb[0].mxu0
    %v339 = vadd.f32 0.0, %v338
    %v340 = vpop.f32.mrb[0].mxu0
    %341 = vmatprep.mubr.bf16.mxu0 %v209
    %342 = vmatmul.mubr.bf16.gmra.mrb[0].mxu0 %v208
    %v343 = vpop.f32.mrb[0].mxu0
    %v344 = vadd.f32 0.0, %v343
    %v345 = vpop.f32.mrb[0].mxu0
    %v346 = vpop.f32.mrb[0].mxu0
    %v347 = vadd.f32 0.0, %v346
    %v348 = vpop.f32.mrb[0].mxu0
    %349 = vmatprep.mubr.bf16.mxu0 %v212
    %350 = vmatmul.mubr.bf16.gmra.mrb[0].mxu0 %v211
    %v351 = vpop.f32.mrb[0].mxu0
    %v352 = vadd.f32 0.0, %v351
    %v353 = vpop.f32.mrb[0].mxu0
    %v354 = vpop.f32.mrb[0].mxu0
    %v355 = vadd.f32 0.0, %v354
    %v356 = vpop.f32.mrb[0].mxu0
    %357 = vmatprep.mubr.bf16.mxu0 %v215
    %358 = vmatmul.mubr.bf16.gmra.mrb[0].mxu0 %v214
    %v359 = vpop.f32.mrb[0].mxu0
    %v360 = vadd.f32 0.0, %v359
    %v361 = vpop.f32.mrb[0].mxu0
    %v362 = vpop.f32.mrb[0].mxu0
    %v363 = vadd.f32 0.0, %v362
    %v364 = vpop.f32.mrb[0].mxu0
    %365 = vmatprep.mubr.bf16.mxu0 %v218
    %366 = vmatmul.mubr.bf16.gmra.mrb[0].mxu0 %v217
    %v367 = vpop.f32.mrb[0].mxu0
    %v368 = vadd.f32 0.0, %v367
    %v369 = vpop.f32.mrb[0].mxu0
    %v370 = vpop.f32.mrb[0].mxu0
    %v371 = vadd.f32 0.0, %v370
    %v372 = vpop.f32.mrb[0].mxu0
    %373 = vmatprep.mubr.bf16.mxu0 %v221
    %374 = vmatmul.mubr.bf16.gmra.mrb[0].mxu0 %v220
    %v375 = vpop.f32.mrb[0].mxu0
    %v376 = vadd.f32 0.0, %v375
    %v377 = vpop.f32.mrb[0].mxu0
    %v378 = vpop.f32.mrb[0].mxu0
    %v379 = vadd.f32 0.0, %v378
    %v380 = vpop.f32.mrb[0].mxu0
    %381 = vmatprep.mubr.bf16.mxu0 %v224
    %382 = vmatmul.mubr.bf16.gmra.mrb[0].mxu0 %v223
    %v383 = vpop.f32.mrb[0].mxu0
    %v384 = vadd.f32 0.0, %v383
    %v385 = vpop.f32.mrb[0].mxu0
    %v386 = vpop.f32.mrb[0].mxu0
    %v387 = vadd.f32 0.0, %v386
    %v388 = vpop.f32.mrb[0].mxu0
    %389 = vmatprep.mubr.bf16.mxu0 %v227
    %390 = vmatmul.mubr.bf16.gmra.mrb[0].mxu0 %v226
    %v391 = vpop.f32.mrb[0].mxu0
    %v392 = vadd.f32 0.0, %v391
    %v393 = vpop.f32.mrb[0].mxu0
    %v394 = vpop.f32.mrb[0].mxu0
    %v395 = vadd.f32 0.0, %v394
    %v396 = vpop.f32.mrb[0].mxu0
    %397 = vdwg.mxu0
    %398 = vmatprep.subr.bf16.mxu0 0
    %399 = vmatpush1.bf16.msra.mxu0 %v293
    %400 = vmatprep.subr.bf16.mxu0 0
    %401 = vmatpush1.bf16.msra.mxu0 %v294
    %402 = vmatprep.subr.bf16.mxu0 0
    %403 = vmatpush1.bf16.msra.mxu0 %v295
    %404 = vmatprep.subr.bf16.mxu0 0
    %405 = vmatpush1.bf16.msra.mxu0 %v296
    %406 = vmatprep.subr.bf16.mxu0 0
    %407 = vmatpush1.bf16.msra.mxu0 %v297
    %408 = vmatprep.subr.bf16.mxu0 0
    %409 = vmatpush1.bf16.msra.mxu0 %v298
    %410 = vmatprep.subr.bf16.mxu0 0
    %411 = vmatpush1.bf16.msra.mxu0 %v299
    %412 = vmatprep.subr.bf16.mxu0 0
    %413 = vmatpush1.bf16.msra.mxu0 %v300
    %414 = vmatprep.subr.bf16.mxu0 0
    %415 = vmatpush1.bf16.msra.mxu0 0
    %416 = vmatprep.subr.bf16.mxu0 0
    %417 = vmatpush1.bf16.msra.mxu0 0
    %418 = vmatprep.subr.bf16.mxu0 0
    %419 = vmatpush1.bf16.msra.mxu0 0
    %420 = vmatprep.subr.bf16.mxu0 0
    %421 = vmatpush1.bf16.msra.mxu0 0
    %422 = vmatprep.subr.bf16.mxu0 0
    %423 = vmatpush1.bf16.msra.mxu0 0
    %424 = vmatprep.subr.bf16.mxu0 0
    %425 = vmatpush1.bf16.msra.mxu0 0
    %426 = vmatprep.subr.bf16.mxu0 0
    %427 = vmatpush1.bf16.msra.mxu0 0
    %428 = vmatprep.subr.bf16.mxu0 0
    %429 = vmatpush1.bf16.msra.mxu0 0
    %430 = vmatprep.mubr.bf16.mxu0 0
    %431 = vmatmul.mubr.bf16.gmra.mrb[0].mxu0 %v207
    %v432 = vpop.f32.mrb[0].mxu0
    %v433 = vadd.f32 %v336, %v432
    %v434 = vpop.f32.mrb[0].mxu0
    %v435 = vpop.f32.mrb[0].mxu0
    %v436 = vadd.f32 %v339, %v435
    %v437 = vpop.f32.mrb[0].mxu0
    %438 = vmatprep.mubr.bf16.mxu0 0
    %439 = vmatmul.mubr.bf16.gmra.mrb[0].mxu0 %v210
    %v440 = vpop.f32.mrb[0].mxu0
    %v441 = vadd.f32 %v344, %v440
    %v442 = vpop.f32.mrb[0].mxu0
    %v443 = vpop.f32.mrb[0].mxu0
    %v444 = vadd.f32 %v347, %v443
    %v445 = vpop.f32.mrb[0].mxu0
    %446 = vmatprep.mubr.bf16.mxu0 0
    %447 = vmatmul.mubr.bf16.gmra.mrb[0].mxu0 %v213
    %v448 = vpop.f32.mrb[0].mxu0
    %v449 = vadd.f32 %v352, %v448
    %v450 = vpop.f32.mrb[0].mxu0
    %v451 = vpop.f32.mrb[0].mxu0
    %v452 = vadd.f32 %v355, %v451
    %v453 = vpop.f32.mrb[0].mxu0
    %454 = vmatprep.mubr.bf16.mxu0 0
    %455 = vmatmul.mubr.bf16.gmra.mrb[0].mxu0 %v216
    %v456 = vpop.f32.mrb[0].mxu0
    %v457 = vadd.f32 %v360, %v456
    %v458 = vpop.f32.mrb[0].mxu0
    %v459 = vpop.f32.mrb[0].mxu0
    %v460 = vadd.f32 %v363, %v459
    %v461 = vpop.f32.mrb[0].mxu0
    %462 = vmatprep.mubr.bf16.mxu0 0
    %463 = vmatmul.mubr.bf16.gmra.mrb[0].mxu0 %v219
    %v464 = vpop.f32.mrb[0].mxu0
    %v465 = vadd.f32 %v368, %v464
    %v466 = vpop.f32.mrb[0].mxu0
    %v467 = vpop.f32.mrb[0].mxu0
    %v468 = vadd.f32 %v371, %v467
    %v469 = vpop.f32.mrb[0].mxu0
    %470 = vmatprep.mubr.bf16.mxu0 0
    %471 = vmatmul.mubr.bf16.gmra.mrb[0].mxu0 %v222
    %v472 = vpop.f32.mrb[0].mxu0
    %v473 = vadd.f32 %v376, %v472
    %v474 = vpop.f32.mrb[0].mxu0
    %v475 = vpop.f32.mrb[0].mxu0
    %v476 = vadd.f32 %v379, %v475
    %v477 = vpop.f32.mrb[0].mxu0
    %478 = vmatprep.mubr.bf16.mxu0 0
    %479 = vmatmul.mubr.bf16.gmra.mrb[0].mxu0 %v225
    %v480 = vpop.f32.mrb[0].mxu0
    %v481 = vadd.f32 %v384, %v480
    %v482 = vpop.f32.mrb[0].mxu0
    %v483 = vpop.f32.mrb[0].mxu0
    %v484 = vadd.f32 %v387, %v483
    %v485 = vpop.f32.mrb[0].mxu0
    %486 = vmatprep.mubr.bf16.mxu0 0
    %487 = vmatmul.mubr.bf16.gmra.mrb[0].mxu0 %v228
    %v488 = vpop.f32.mrb[0].mxu0
    %v489 = vadd.f32 %v392, %v488
    %v490 = vpop.f32.mrb[0].mxu0
    %v491 = vpop.f32.mrb[0].mxu0
    %v492 = vadd.f32 %v395, %v491
    %v493 = vpop.f32.mrb[0].mxu0
    %494 = vdwg.mxu0
    %v495 = vadd.f32 %v433, %v436
    %v496 = vadd.f32 %v495, %v441
    %v497 = vadd.f32 %v496, %v444
    %v498 = vadd.f32 %v497, %v449
    %v499 = vadd.f32 %v498, %v452
    %v500 = vadd.f32 %v499, %v457
    %v501 = vadd.f32 %v500, %v460
    %v502 = vadd.f32 %v501, %v465
    %v503 = vadd.f32 %v502, %v468
    %v504 = vadd.f32 %v503, %v473
    %v505 = vadd.f32 %v504, %v476
    %v506 = vadd.f32 %v505, %v481
    %v507 = vadd.f32 %v506, %v484
    %v508 = vadd.f32 %v507, %v489
    %v509 = vadd.f32 %v508, %v492
    %v510 = vrot.slane %v509, 4
    %v511 = vadd.f32 %v509, %v510
    %v512 = vrot.slane %v511, 2
    %v513 = vadd.f32 %v511, %v512
    %v514 = vrot.slane %v513, 1
    %v515 = vadd.f32 %v513, %v514
    %v516 = vmul.f32 %v515, 0.0078125
    %v517 = vsub.f32 %v433, %v516
    %v518 = vsub.f32 %v436, %v516
    %v519 = vsub.f32 %v441, %v516
    %v520 = vsub.f32 %v444, %v516
    %v521 = vsub.f32 %v449, %v516
    %v522 = vsub.f32 %v452, %v516
    %v523 = vsub.f32 %v457, %v516
    %v524 = vsub.f32 %v460, %v516
    %v525 = vsub.f32 %v465, %v516
    %v526 = vsub.f32 %v468, %v516
    %v527 = vsub.f32 %v473, %v516
    %v528 = vsub.f32 %v476, %v516
    %v529 = vsub.f32 %v481, %v516
    %v530 = vsub.f32 %v484, %v516
    %v531 = vsub.f32 %v489, %v516
    %v532 = vsub.f32 %v492, %v516
    %v533 = vmul.f32 %v517, %v517
    %v534 = vmul.f32 %v518, %v518
    %v535 = vmul.f32 %v519, %v519
    %v536 = vmul.f32 %v520, %v520
    %v537 = vmul.f32 %v521, %v521
    %v538 = vmul.f32 %v522, %v522
    %v539 = vmul.f32 %v523, %v523
    %v540 = vmul.f32 %v524, %v524
    %v541 = vmul.f32 %v525, %v525
    %v542 = vmul.f32 %v526, %v526
    %v543 = vmul.f32 %v527, %v527
    %v544 = vmul.f32 %v528, %v528
    %v545 = vmul.f32 %v529, %v529
    %v546 = vmul.f32 %v530, %v530
    %v547 = vmul.f32 %v531, %v531
    %v548 = vmul.f32 %v532, %v532
    %v549 = vadd.f32 %v533, %v534
    %v550 = vadd.f32 %v549, %v535
    %v551 = vadd.f32 %v550, %v536
    %v552 = vadd.f32 %v551, %v537
    %v553 = vadd.f32 %v552, %v538
    %v554 = vadd.f32 %v553, %v539
    %v555 = vadd.f32 %v554, %v540
    %v556 = vadd.f32 %v555, %v541
    %v557 = vadd.f32 %v556, %v542
    %v558 = vadd.f32 %v557, %v543
    %v559 = vadd.f32 %v558, %v544
    %v560 = vadd.f32 %v559, %v545
    %v561 = vadd.f32 %v560, %v546
    %v562 = vadd.f32 %v561, %v547
    %v563 = vadd.f32 %v562, %v548
    %v564 = vrot.slane %v563, 4
    %v565 = vadd.f32 %v563, %v564
    %v566 = vrot.slane %v565, 2
    %v567 = vadd.f32 %v565, %v566
    %v568 = vrot.slane %v567, 1
    %v569 = vadd.f32 %v567, %v568
    %v570 = vmul.f32 %v569, 0.0078125
    %v571 = vadd.f32 %v570, 1e-05
    %v572 = vrsqrt.pop %v571
    %v573 = vld [vmem:[%s3] sm:$0x1]
    %v574 = vmul.f32 %v572, %v573
    %v575 = vlaneseq
    %v576 = vshrl.u32 %v575, 7
    %v577 = vsub.s32 0, %v576
    %v578 = vrot.slane %v574, %v577
    %v579 = vmul.f32 %v517, %v578
    %v580 = vmul.f32 %v518, %v578
    %v581 = vmul.f32 %v519, %v578
    %v582 = vmul.f32 %v520, %v578
    %v583 = vmul.f32 %v521, %v578
    %v584 = vmul.f32 %v522, %v578
    %v585 = vmul.f32 %v523, %v578
    %v586 = vmul.f32 %v524, %v578
    %v587 = vmul.f32 %v525, %v578
    %v588 = vmul.f32 %v526, %v578
    %v589 = vmul.f32 %v527, %v578
    %v590 = vmul.f32 %v528, %v578
    %v591 = vmul.f32 %v529, %v578
    %v592 = vmul.f32 %v530, %v578
    %v593 = vmul.f32 %v531, %v578
    %v594 = vmul.f32 %v532, %v578
    %v595 = vld [vmem:[%s4] sm:$0x1]
    %v597 = vlaneseq
    %v598 = vshrl.u32 %v597, 7
    %v599 = vsub.s32 0, %v598
    %v600 = vrot.slane %v595, %v599
    %v602 = vadd.f32 %v579, %v600
    %v603 = vadd.f32 %v580, %v600
    %v604 = vadd.f32 %v581, %v600
    %v605 = vadd.f32 %v582, %v600
    %v606 = vadd.f32 %v583, %v600
    %v607 = vadd.f32 %v584, %v600
    %v608 = vadd.f32 %v585, %v600
    %v609 = vadd.f32 %v586, %v600
    %v610 = vadd.f32 %v587, %v600
    %v611 = vadd.f32 %v588, %v600
    %v612 = vadd.f32 %v589, %v600
    %v613 = vadd.f32 %v590, %v600
    %v614 = vadd.f32 %v591, %v600
    %v615 = vadd.f32 %v592, %v600
    %v616 = vadd.f32 %v593, %v600
    %v617 = vadd.f32 %v594, %v600
    %618 = vst [vmem:[#allocation8] sm:$0xff] %v602
    %619 = vst [vmem:[#allocation8 + $0x8] sm:$0xff] %v603
    %620 = vst [vmem:[#allocation8 + $0x10] sm:$0xff] %v604
    %621 = vst [vmem:[#allocation8 + $0x18] sm:$0xff] %v605
    %622 = vst [vmem:[#allocation8 + $0x20] sm:$0xff] %v606
    %623 = vst [vmem:[#allocation8 + $0x28] sm:$0xff] %v607
    %624 = vst [vmem:[#allocation8 + $0x30] sm:$0xff] %v608
    %625 = vst [vmem:[#allocation8 + $0x38] sm:$0xff] %v609
    %626 = vst [vmem:[#allocation8 + $0x40] sm:$0xff] %v610
    %627 = vst [vmem:[#allocation8 + $0x48] sm:$0xff] %v611
    %628 = vst [vmem:[#allocation8 + $0x50] sm:$0xff] %v612
    %629 = vst [vmem:[#allocation8 + $0x58] sm:$0xff] %v613
    %630 = vst [vmem:[#allocation8 + $0x60] sm:$0xff] %v614
    %631 = vst [vmem:[#allocation8 + $0x68] sm:$0xff] %v615
    %632 = vst [vmem:[#allocation8 + $0x70] sm:$0xff] %v616
    %633 = vst [vmem:[#allocation8 + $0x78] sm:$0xff] %v617
    // Predicated region
    $region34: #{tpu_custom_call.1} parent=1 // pred_check
      _
    $region35: #{tpu_custom_call.1} parent=1 // pred_check_branch
      %635 = sbr.rel (0) target = $region37
    $region36: #{tpu_custom_call.1} parent=1 // pred_region
      %s637 = ssub.s32 2048, 2048
      %638 = vsyncadd [#allocation4], %s637
      %s639 = sshll.u32 [#allocation8], 4
      %s640 = int_to_ptr.vmem [resolvable:$true] %s639
      %645 = dma.vmem_to_hbm [thread:$0]  %s640, 2048, %s5, [#allocation4], 128, 128, 8
    $region37: #{tpu_custom_call.1} parent=1 // pred_fallthru
      _
    // Predicated region
    $region38: #{tpu_custom_call.1} parent=1 // pred_check
      _
    $region39: #{tpu_custom_call.1} parent=1 // pred_check_branch
      %647 = sbr.rel (0) target = $region41
    $region40: #{tpu_custom_call.1} parent=1 // pred_region
      %648 = dma.done [#allocation4], 2048
    $region41: #{tpu_custom_call.1} parent=1 // pred_fallthru
      _
    %649 = vsyncpa [#allocation3], 1
    %650 = vsyncpa [#allocation6], 1
    %651 = vsyncpa [#allocation4], 1

</llo_original>
